<compile_context>
chip_gen: v7x
topology: tpu7x:2x2x1
jax: 0.10.0
libtpu: 0.0.40
codegen_flags: <defaults>
</compile_context>

<pallas_src>
import jax
import jax.numpy as jnp
from jax.experimental import pallas as pl
from jax.experimental.pallas import tpu as pltpu


def _nll_partial_kernel(pred_ref, target_ref, out_ref):
    # pred_ref:   (TILE_N, C) log-probs (f32 or bf16) in VMEM
    # target_ref: (TILE_N, 1) int32 class indices; padded rows hold -1 so they
    #             never match any column (no row mask needed in-kernel).
    # out_ref:    (1, 128) f32 lane-dense per-tile partial sum
    pred = pred_ref[...]                                       # stay in input dtype
    tgt = target_ref[...]                                      # (TILE_N, 1)
    cols = jax.lax.broadcasted_iota(jnp.int32, pred.shape, 1)
    picked = jnp.where(cols == tgt, pred, jnp.zeros((), pred.dtype))
    partial = jnp.sum(picked, dtype=jnp.float32)               # f32 accumulation only here

    # Lane-dense store (unmasked vst); wrapper reads lane 0 of each tile block.
    out_ref[...] = jnp.full(out_ref.shape, partial, jnp.float32)


def _round_up(x, m):
    return ((x + m - 1) // m) * m


def _choose_tile_n(n, c, dtype):
    itemsize = jnp.dtype(dtype).itemsize
    c_pad = max(_round_up(c, 128), 128)                        # lane padding of pred rows

    # (1) Size by ACTUAL HBM bytes per pred tile (~1 MiB amortizes the fixed
    #     per-grid-step overhead even on v7x's ~2x HBM bandwidth).
    actual_budget = 1 * 1024 * 1024
    tn = max(actual_budget // max(c * itemsize, 1), 8)

    # (2) VMEM feasibility on the PADDED footprint: pred row -> c_pad*itemsize
    #     bytes, target (tn,1) int32 block pads to 128 lanes -> 512 B/row;
    #     x2 double buffers; keep <= ~24 MiB (safe under v7x 32 MiB scoped).
    vmem_budget = 24 * 1024 * 1024
    per_row_padded = c_pad * itemsize + 128 * 4
    tn = min(tn, vmem_budget // (2 * per_row_padded))

    # (3) Keep >= 2 grid steps for moderate N so v7x megacore has work to shard.
    if n > 16:
        tn = min(tn, _round_up(-(-n // 2), 8))

    tn = min(tn, _round_up(n, 8))
    return max((tn // 8) * 8, 8)


def get_loss(pred, target, trans_feat=None, *, tile_n=None):
    """Equivalent of get_loss.forward: F.nll_loss(pred, target) (mean reduction).

    pred:   (N, C) log-probabilities, float32 or bfloat16
    target: (N,)   integer class indices
    trans_feat: ignored (kept for signature parity with the PyTorch module)
    """
    pred = jnp.asarray(pred)
    if pred.dtype != jnp.float32 and pred.dtype != jnp.bfloat16:
        pred = pred.astype(jnp.float32)

    n, c = pred.shape
    tn = tile_n if tile_n is not None else _choose_tile_n(n, c, pred.dtype)
    tn = max(8, (min(tn, _round_up(n, 8)) // 8) * 8)           # sublane aligned
    num_tiles = pl.cdiv(n, tn)
    padded_n = num_tiles * tn

    # Pad target with a -1 sentinel: padded rows never match any column, so the
    # kernel needs no row-validity mask and garbage pred rows in the last
    # partial block contribute exactly 0.
    target = jnp.asarray(target, jnp.int32).reshape(-1)
    if padded_n != n:
        target = jnp.pad(target, (0, padded_n - n), constant_values=-1)
    target = target.reshape(padded_n, 1)                       # (padded_N, 1) for VMEM

    partials = pl.pallas_call(
        _nll_partial_kernel,
        out_shape=jax.ShapeDtypeStruct((1, 128 * num_tiles), jnp.float32),
        grid=(num_tiles,),
        in_specs=[
            pl.BlockSpec((tn, c), lambda i: (i, 0)),           # pred tile
            pl.BlockSpec((tn, 1), lambda i: (i, 0)),           # target tile (sentinel-padded)
        ],
        out_specs=pl.BlockSpec((1, 128), lambda i: (0, i)),    # lane-dense per-tile partial
        compiler_params=pltpu.CompilerParams(
            dimension_semantics=("parallel",),                 # megacore on v7x
            vmem_limit_bytes=32 * 1024 * 1024,                 # explicit (v5e default is 16 MiB)
        ),
    )(pred, target)

    # One scalar per tile lives in lane 0 of each 128-lane group.
    total = partials.reshape(num_tiles, 128)[:, 0].sum()
    return -total / jnp.float32(n)                             # divide by the TRUE N


if __name__ == "__main__":
    key = jax.random.PRNGKey(0)
    k1, k2, k3, k4, k5 = jax.random.split(key, 5)

    # Small shape consistent with the module: batch of 8 samples, 16 classes.
    N, C = 8, 16
    logits = jax.random.normal(k1, (N, C), dtype=jnp.float32)
    pred = jax.nn.log_softmax(logits, axis=-1)                 # model's log-prob output
    target = jax.random.randint(k2, (N,), 0, C, dtype=jnp.int32)
    trans_feat = jax.random.normal(k3, (N, 3, 3), dtype=jnp.float32)  # unused by loss

    loss = get_loss(pred, target, trans_feat)
    jax.block_until_ready(loss)
    ref = -jnp.mean(pred[jnp.arange(N), target])
    assert jnp.allclose(loss, ref, atol=1e-6), (loss, ref)

    # Non-divisible N with bf16 log-probs and an explicit small tile: exercises
    # multi-tile pipelining, sentinel-padded remainder rows, bf16 input path.
    N2, C2 = 300, 40
    logits2 = jax.random.normal(k4, (N2, C2), dtype=jnp.float32)
    pred2 = jax.nn.log_softmax(logits2, axis=-1).astype(jnp.bfloat16)
    target2 = jax.random.randint(k2, (N2,), 0, C2, dtype=jnp.int32)
    loss2 = get_loss(pred2, target2, None, tile_n=128)
    jax.block_until_ready(loss2)
    ref2 = -jnp.mean(pred2.astype(jnp.float32)[jnp.arange(N2), target2])
    assert jnp.allclose(loss2, ref2, atol=1e-3, rtol=1e-3), (loss2, ref2)

    # Auto tile selection path: checks the >=2-grid-step clamp and sentinel
    # padding when N does not divide the chosen tile.
    N3, C3 = 1000, 16
    logits3 = jax.random.normal(k5, (N3, C3), dtype=jnp.float32)
    pred3 = jax.nn.log_softmax(logits3, axis=-1)
    target3 = jax.random.randint(k2, (N3,), 0, C3, dtype=jnp.int32)
    loss3 = get_loss(pred3, target3, None)
    jax.block_until_ready(loss3)
    ref3 = -jnp.mean(pred3[jnp.arange(N3), target3])
    assert jnp.allclose(loss3, ref3, atol=1e-5, rtol=1e-5), (loss3, ref3)

    print("KERNEL_OK")
</pallas_src>

<mosaic_0001>
module attributes {stable_mosaic.version = 11 : i64} {
  func.func @_nll_partial_kernel(%arg0: i32, %arg1: memref<8x16xf32, #tpu.memory_space<vmem>>, %arg2: memref<8x1xi32, #tpu.memory_space<vmem>>, %arg3: memref<1x128xf32, #tpu.memory_space<vmem>>) attributes {dimension_semantics = [#tpu.dimension_semantics<parallel>], iteration_bounds = array<i64: 1>, scalar_prefetch = 0 : i64, scratch_operands = 0 : i64, tpu.core_type = #tpu.core_type<tc>, window_params = [{transform_indices = @transform_0, window_bounds = array<i64: 8, 16>}, {transform_indices = @transform_1, window_bounds = array<i64: 8, 1>}, {transform_indices = @transform_2, window_bounds = array<i64: 1, 128>}]} {
    %c0 = arith.constant 0 : index
    %c0_0 = arith.constant 0 : index
    %0 = vector.load %arg1[%c0, %c0_0] : memref<8x16xf32, #tpu.memory_space<vmem>>, vector<8x16xf32>
    %c0_1 = arith.constant 0 : index
    %c0_2 = arith.constant 0 : index
    %1 = vector.load %arg2[%c0_1, %c0_2] : memref<8x1xi32, #tpu.memory_space<vmem>>, vector<8x1xi32>
    %2 = tpu.iota {dimensions = array<i32: 1>} : vector<8x16xi32>
    %3 = vector.broadcast %1 : vector<8x1xi32> to vector<8x16xi32>
    %4 = arith.cmpi eq, %2, %3 : vector<8x16xi32>
    %cst = arith.constant 0.000000e+00 : f32
    %5 = vector.broadcast %cst : f32 to vector<8x16xf32>
    %6 = arith.select %4, %0, %5 : vector<8x16xi1>, vector<8x16xf32>
    %7 = vector.shape_cast %6 : vector<8x16xf32> to vector<1x8x16xf32>
    %cst_3 = arith.constant dense<0.000000e+00> : vector<1xf32>
    %8 = vector.multi_reduction <add>, %7, %cst_3 [1, 2] : vector<1x8x16xf32> to vector<1xf32>
    %9 = vector.shape_cast %8 : vector<1xf32> to vector<1x1x1xf32>
    %10 = vector.extract %9[0, 0, 0] : f32 from vector<1x1x1xf32>
    %11 = vector.broadcast %10 : f32 to vector<1x128xf32>
    %c0_4 = arith.constant 0 : index
    %c0_5 = arith.constant 0 : index
    %12 = vector.load %arg3[%c0_4, %c0_5] : memref<1x128xf32, #tpu.memory_space<vmem>>, vector<1x128xf32>
    tpu.vector_store %arg3[%c0_4, %c0_5], %11 {strides = array<i32>} : memref<1x128xf32, #tpu.memory_space<vmem>>, vector<1x128xf32>,
    return
  }
  func.func @transform_0(%arg0: i32) -> (i32, i32) {
    %c0_i32 = arith.constant 0 : i32
    %c0_i32_0 = arith.constant 0 : i32
    return %arg0, %c0_i32 : i32, i32
  }
  func.func @transform_1(%arg0: i32) -> (i32, i32) {
    %c0_i32 = arith.constant 0 : i32
    %c0_i32_0 = arith.constant 0 : i32
    return %arg0, %c0_i32 : i32, i32
  }
  func.func @transform_2(%arg0: i32) -> (i32, i32) {
    %c0_i32 = arith.constant 0 : i32
    %c0_i32_0 = arith.constant 0 : i32
    return %c0_i32, %arg0 : i32, i32
  }
}

</mosaic_0001>

<llo_original>
// kernel: tpu_custom_call.1
$region0: #{tpu_custom_call.1}
  #allocation0 [shape = 'u32[]', space=smem, size = 0x4, offset = 0x4, fixed_abs, tag = 'smem constant byte address 0x4 - core index']
  #allocation1 [shape = 'u32[144,128]{1,0:T(1,128)}', space=vmem, size = 0x12000, scoped, tag = 'internal scratch']
  %s0 = inlined_call_operand.vmem [shape: f32[8,16], index: 0, kind: input, shape index: {}]
  %s1 = inlined_call_operand.vmem [shape: s32[8,1], index: 1, kind: input, shape index: {}]
  %s2 = inlined_call_operand.hbm [shape: f32[1,128], index: 2, kind: output, shape index: {}]
  %s3 = sld [smem:[#allocation0]]
  $region18: #{tpu_custom_call.1} parent=0
    _
  %s5 = ssub.s32 1, %s3
  %s6 = scalar_select 0, %s5, %s3
  $region1: #{tpu_custom_call.1} parent=0
    #allocation2 [shape = 'u8[512]{0}', space=vmem, size = 0x400, scoped, tag = 'output window, operand 0, single buffered']
    #allocation3 [shape = 's32[1]{0}', space=sflag, size = 0x4, scoped, tag = 'scoped memory for tpu_custom_call.1']
    %7 = vsyncpa [#allocation3], 0
    // Predicated region
    $region2: #{tpu_custom_call.1} parent=1 // pred_check
      _
    $region3: #{tpu_custom_call.1} parent=1 // pred_check_branch
      %9 = sbr.rel (0) target = $region5
    $region4: #{tpu_custom_call.1} parent=1 // pred_region
      _
    $region5: #{tpu_custom_call.1} parent=1 // pred_fallthru
      _
    // Predicated region
    $region6: #{tpu_custom_call.1} parent=1 // pred_check
      _
    $region7: #{tpu_custom_call.1} parent=1 // pred_check_branch
      %11 = sbr.rel (0) target = $region9
    $region8: #{tpu_custom_call.1} parent=1 // pred_region
      _
    $region9: #{tpu_custom_call.1} parent=1 // pred_fallthru
      _
    %v12 = vld [vmem:[%s0] sm:$0xff]
    %v13 = vld [vmem:[%s1] sm:$0xff]
    %v14 = vlaneseq
    %v15 = vand.u32 %v14, 127
    %16 = vset.pattern.permute.xlu0 0
    %17 = vperm.xlu0 %16, %v13
    %v18 = vpop.permute.xlu0 %17
    %vm19 = vcmp.eq.s32.totalorder %v15, %v18
    %v20 = vsel %vm19, %v12, 0.0
    %vm21 = vcmask 130048
    %v22 = vsel %vm21, %v20, 0.0
    %23 = vadd.xlane.f32.xlu0 %v22
    %v24 = vpop.xlane.xlu0 %23
    %v25 = vrot.slane %v24, 4
    %v26 = vadd.f32 %v24, %v25
    %v27 = vrot.slane %v26, 2
    %v28 = vadd.f32 %v26, %v27
    %v29 = vrot.slane %v28, 1
    %v30 = vadd.f32 %v28, %v29
    %s31 = vtos %v30
    %v32 = vstv %s31
    %33 = vst [vmem:[#allocation2] sm:$0x1] %v32
    // Predicated region
    $region10: #{tpu_custom_call.1} parent=1 // pred_check
      _
    $region11: #{tpu_custom_call.1} parent=1 // pred_check_branch
      %35 = sbr.rel (0) target = $region13
    $region12: #{tpu_custom_call.1} parent=1 // pred_region
      %s37 = ssub.s32 16, 16
      %38 = vsyncadd [#allocation3], %s37
      %s40 = sshll.u32 [#allocation2], 4
      %s41 = int_to_ptr.vmem [resolvable:$true] %s40
      %43 = dma.vmem_to_hbm [thread:$0]  %s41, 16, %s2, [#allocation3]
    $region13: #{tpu_custom_call.1} parent=1 // pred_fallthru
      _
    // Predicated region
    $region14: #{tpu_custom_call.1} parent=1 // pred_check
      _
    $region15: #{tpu_custom_call.1} parent=1 // pred_check_branch
      %45 = sbr.rel (0) target = $region17
    $region16: #{tpu_custom_call.1} parent=1 // pred_region
      %46 = dma.done [#allocation3], 16
    $region17: #{tpu_custom_call.1} parent=1 // pred_fallthru
      _
    %47 = vsyncpa [#allocation3], 1

</llo_original>
